<compile_context>
chip_gen: v7x
topology: tpu7x:2x2x1
jax: 0.10.0
libtpu: 0.0.40
codegen_flags: <defaults>
</compile_context>

<pallas_src>
import functools

import jax
import jax.numpy as jnp
import numpy as np
from jax.experimental import pallas as pl
from jax.experimental.pallas import tpu as pltpu


def _round_up(x: int, m: int) -> int:
    return (x + m - 1) // m * m


def _ce_contrastive_kernel(rows_ref, cols_ref, o_ref,
                           m_sc, l_sc, t_sc,
                           *, batch: int, inv_temp: float):
    i = pl.program_id(0)            # row-tile index ("parallel")
    j = pl.program_id(1)            # col-tile index (reduction, innermost)
    n_j = pl.num_programs(1)

    # ---- init the per-row-tile running stats at the first column tile --------
    @pl.when(j == 0)
    def _():
        m_sc[...] = jnp.full_like(m_sc, -jnp.inf)
        l_sc[...] = jnp.zeros_like(l_sc)
        t_sc[...] = jnp.zeros_like(t_sc)

    # ---- (TR, TC) block of the similarity matrix on the MXU ------------------
    s = jax.lax.dot_general(
        rows_ref[...], cols_ref[...],
        dimension_numbers=(((1,), (1,)), ((), ())),      # E_rows @ E_cols.T
        preferred_element_type=jnp.float32,
    ) * jnp.float32(inv_temp)

    tr, tc = s.shape
    row_ids = i * tr + jax.lax.broadcasted_iota(jnp.int32, (tr, tc), 0)
    col_ids = j * tc + jax.lax.broadcasted_iota(jnp.int32, (tr, tc), 1)
    col_valid = col_ids < batch                          # mask padded columns

    # ---- streaming logsumexp over column tiles (VPU/EUP, hidden under MXU) ---
    s_m = jnp.where(col_valid, s, -jnp.inf)
    m_prev = m_sc[...]
    m_new = jnp.maximum(m_prev, jnp.max(s_m, axis=1, keepdims=True))
    alpha = jnp.exp(m_prev - m_new)
    p = jnp.exp(s_m - m_new)
    l_sc[...] = alpha * l_sc[...] + jnp.sum(p, axis=1, keepdims=True)
    m_sc[...] = m_new

    # ---- per-row target logit (the column CrossEntropy picks) ----------------
    tgt_col = jnp.where(row_ids < batch - 1, row_ids + 1, batch - 1)
    tgt_mask = (col_ids == tgt_col) & col_valid
    t_sc[...] += jnp.sum(jnp.where(tgt_mask, s, 0.0), axis=1, keepdims=True)

    # ---- finalize: per-row loss for this row tile (padded rows -> 0) ---------
    @pl.when(j == n_j - 1)
    def _():
        lse = m_sc[...] + jnp.log(l_sc[...])                       # (TR, 1)
        rids = i * tr + jax.lax.broadcasted_iota(jnp.int32, (tr, 1), 0)
        o_ref[...] = jnp.where(rids < batch, lse - t_sc[...], 0.0)


def contrastive_loss_cross_entropy(embeddings: jax.Array,
                                   temperature: float,
                                   labels=None,
                                   *,
                                   max_rows_per_tile: int = 256) -> jax.Array:
    """Pallas TPU implementation of ContrastiveLossCrossEntropy.forward.

    `labels` is accepted for signature parity but — exactly like the original
    PyTorch module — it is ignored (the module overwrites it with arange(B)).
    """
    del labels
    assert embeddings.ndim == 2, "expect (B, D) embeddings"
    B, D = embeddings.shape

    # Tile cap: keep 2 inputs x 2 pipeline buffers (~16 * tile * D bytes) under
    # ~8 MiB so the kernel fits the scoped-VMEM default on v5e/v6e/v7x.
    vmem_cap_tile = max(8, ((1 << 19) // max(D, 1)) // 8 * 8)
    cap = max(8, min(max_rows_per_tile, 256, vmem_cap_tile))

    # Balanced tiling: minimize padding waste (tile is a multiple of 8).
    n_tiles = -(-B // cap)                       # cdiv(B, cap)
    tile = _round_up(-(-B // n_tiles), 8)        # cdiv(B, n_tiles) rounded to 8
    B_pad = n_tiles * tile
    if B_pad != B:
        embeddings = jnp.pad(embeddings, ((0, B_pad - B), (0, 0)))

    kernel = functools.partial(
        _ce_contrastive_kernel,
        batch=B,
        inv_temp=1.0 / float(temperature),
    )

    per_row = pl.pallas_call(
        kernel,
        out_shape=jax.ShapeDtypeStruct((B_pad, 1), jnp.float32),
        grid_spec=pltpu.PrefetchScalarGridSpec(
            num_scalar_prefetch=0,
            grid=(n_tiles, n_tiles),
            in_specs=[
                pl.BlockSpec((tile, D), lambda i, j: (i, 0)),   # "query" rows
                pl.BlockSpec((tile, D), lambda i, j: (j, 0)),   # "key" rows
            ],
            out_specs=pl.BlockSpec((tile, 1), lambda i, j: (i, 0)),
            scratch_shapes=[
                pltpu.VMEM((tile, 1), jnp.float32),   # running row max
                pltpu.VMEM((tile, 1), jnp.float32),   # running row sum(exp)
                pltpu.VMEM((tile, 1), jnp.float32),   # per-row target logit
            ],
        ),
        compiler_params=pltpu.CompilerParams(
            # Row tiles are independent (each writes its own output block and
            # re-inits its scratch at j == 0) -> megacore-shardable on v7x.
            # Column axis is the logsumexp reduction -> innermost, arbitrary.
            dimension_semantics=("parallel", "arbitrary"),
            vmem_limit_bytes=64 * 1024 * 1024,
        ),
    )(embeddings, embeddings)

    # Tiny epilogue in plain XLA: mean over the B valid rows.
    return jnp.sum(per_row) / jnp.float32(B)


def _reference(embeddings, temperature):
    """Literal NumPy transcription of the PyTorch forward."""
    emb = np.asarray(embeddings, dtype=np.float64)
    B = emb.shape[0]
    sim = emb @ emb.T / float(temperature)
    mask = np.eye(B, dtype=bool)
    positives = sim[~mask].reshape(B, B - 1)
    negatives = sim[mask].reshape(B, 1)
    logits = np.concatenate([positives, negatives], axis=1)
    labels = np.arange(B)
    m = logits.max(axis=1, keepdims=True)
    lse = m[:, 0] + np.log(np.exp(logits - m).sum(axis=1))
    tgt = logits[np.arange(B), labels]
    return float(np.mean(lse - tgt))


def _make_embeddings(key, B, D):
    emb = jax.random.normal(key, (B, D), dtype=jnp.float32)
    # L2-normalize (typical for contrastive embeddings; keeps logits well
    # conditioned so f32 vs f64 comparison is tight).
    return emb / jnp.linalg.norm(emb, axis=1, keepdims=True)


if __name__ == "__main__":
    key = jax.random.PRNGKey(0)
    temperature = 0.5
    k0, k1, k2 = jax.random.split(key, 3)

    # 1) Small batch, single tile.
    emb = _make_embeddings(k0, 8, 32)
    loss = jax.block_until_ready(contrastive_loss_cross_entropy(emb, temperature))
    ref = _reference(emb, temperature)
    assert np.allclose(float(loss), ref, atol=1e-4, rtol=1e-4), (float(loss), ref)

    # 2) Non-multiple-of-8 batch: exercises padding / column masking.
    emb2 = _make_embeddings(k1, 13, 32)
    loss2 = jax.block_until_ready(contrastive_loss_cross_entropy(emb2, temperature))
    ref2 = _reference(emb2, temperature)
    assert np.allclose(float(loss2), ref2, atol=1e-4, rtol=1e-4), (float(loss2), ref2)

    # 3) Multi-tile grid (3x3) with a small forced tile: exercises the
    #    streaming logsumexp across column tiles and per-row-tile outputs.
    emb3 = _make_embeddings(k2, 24, 32)
    loss3 = jax.block_until_ready(
        contrastive_loss_cross_entropy(emb3, temperature, max_rows_per_tile=8))
    ref3 = _reference(emb3, temperature)
    assert np.allclose(float(loss3), ref3, atol=1e-4, rtol=1e-4), (float(loss3), ref3)

    print("KERNEL_OK")
</pallas_src>

<mosaic_0001>
module attributes {stable_mosaic.version = 11 : i64} {
  func.func @_ce_contrastive_kernel(%arg0: i32, %arg1: i32, %arg2: memref<8x32xf32, #tpu.memory_space<vmem>>, %arg3: memref<8x32xf32, #tpu.memory_space<vmem>>, %arg4: memref<8x1xf32, #tpu.memory_space<vmem>>, %arg5: memref<8x1xf32, #tpu.memory_space<vmem>>, %arg6: memref<8x1xf32, #tpu.memory_space<vmem>>, %arg7: memref<8x1xf32, #tpu.memory_space<vmem>>) attributes {dimension_semantics = [#tpu.dimension_semantics<parallel>, #tpu.dimension_semantics<arbitrary>], iteration_bounds = array<i64: 1, 1>, scalar_prefetch = 0 : i64, scratch_operands = 3 : i64, tpu.core_type = #tpu.core_type<tc>, window_params = [{transform_indices = @transform_0, window_bounds = array<i64: 8, 32>}, {transform_indices = @transform_1, window_bounds = array<i64: 8, 32>}, {transform_indices = @transform_2, window_bounds = array<i64: 8, 1>}]} {
    %c0_i32 = arith.constant 0 : i32
    %0 = arith.cmpi eq, %arg1, %c0_i32 : i32
    %1 = arith.extui %0 : i1 to i32
    %c0_i32_0 = arith.constant 0 : i32
    %2 = arith.cmpi ne, %1, %c0_i32_0 : i32
    scf.if %2 {
      %cst_27 = arith.constant 0xFF800000 : f32
      %54 = vector.broadcast %cst_27 : f32 to vector<8x1xf32>
      %c0_28 = arith.constant 0 : index
      %c0_29 = arith.constant 0 : index
      %55 = vector.load %arg5[%c0_28, %c0_29] : memref<8x1xf32, #tpu.memory_space<vmem>>, vector<8x1xf32>
      tpu.vector_store %arg5[%c0_28, %c0_29], %54 {strides = array<i32>} : memref<8x1xf32, #tpu.memory_space<vmem>>, vector<8x1xf32>,
      %cst_30 = arith.constant 0.000000e+00 : f32
      %56 = vector.broadcast %cst_30 : f32 to vector<8x1xf32>
      %c0_31 = arith.constant 0 : index
      %c0_32 = arith.constant 0 : index
      %57 = vector.load %arg6[%c0_31, %c0_32] : memref<8x1xf32, #tpu.memory_space<vmem>>, vector<8x1xf32>
      tpu.vector_store %arg6[%c0_31, %c0_32], %56 {strides = array<i32>} : memref<8x1xf32, #tpu.memory_space<vmem>>, vector<8x1xf32>,
      %cst_33 = arith.constant 0.000000e+00 : f32
      %58 = vector.broadcast %cst_33 : f32 to vector<8x1xf32>
      %c0_34 = arith.constant 0 : index
      %c0_35 = arith.constant 0 : index
      %59 = vector.load %arg7[%c0_34, %c0_35] : memref<8x1xf32, #tpu.memory_space<vmem>>, vector<8x1xf32>
      tpu.vector_store %arg7[%c0_34, %c0_35], %58 {strides = array<i32>} : memref<8x1xf32, #tpu.memory_space<vmem>>, vector<8x1xf32>,
    } else {
    }
    %c0 = arith.constant 0 : index
    %c0_1 = arith.constant 0 : index
    %3 = vector.load %arg2[%c0, %c0_1] : memref<8x32xf32, #tpu.memory_space<vmem>>, vector<8x32xf32>
    %c0_2 = arith.constant 0 : index
    %c0_3 = arith.constant 0 : index
    %4 = vector.load %arg3[%c0_2, %c0_3] : memref<8x32xf32, #tpu.memory_space<vmem>>, vector<8x32xf32>
    %cst = arith.constant dense<0.000000e+00> : vector<8x8xf32>
    %5 = tpu.matmul %3, %4, %cst {dimension_numbers = #tpu.dot_dimension_numbers<[1], [1], [0], [0], [0, 0, 1, 0], [], []>} : vector<8x32xf32>, vector<8x32xf32>, vector<8x8xf32> -> vector<8x8xf32>
    %cst_4 = arith.constant 2.000000e+00 : f32
    %6 = vector.broadcast %cst_4 : f32 to vector<8x8xf32>
    %7 = arith.mulf %5, %6 : vector<8x8xf32>
    %c8_i32 = arith.constant 8 : i32
    %8 = arith.muli %arg0, %c8_i32 : i32
    %9 = tpu.iota {dimensions = array<i32: 0>} : vector<8x8xi32>
    %10 = vector.broadcast %8 : i32 to vector<8x8xi32>
    %11 = arith.addi %10, %9 : vector<8x8xi32>
    %c8_i32_5 = arith.constant 8 : i32
    %12 = arith.muli %arg1, %c8_i32_5 : i32
    %13 = tpu.iota {dimensions = array<i32: 1>} : vector<8x8xi32>
    %14 = vector.broadcast %12 : i32 to vector<8x8xi32>
    %15 = arith.addi %14, %13 : vector<8x8xi32>
    %c8_i32_6 = arith.constant 8 : i32
    %16 = vector.broadcast %c8_i32_6 : i32 to vector<8x8xi32>
    %17 = arith.cmpi slt, %15, %16 : vector<8x8xi32>
    %cst_7 = arith.constant 0xFF800000 : f32
    %18 = vector.broadcast %cst_7 : f32 to vector<8x8xf32>
    %19 = arith.select %17, %7, %18 : vector<8x8xi1>, vector<8x8xf32>
    %c0_8 = arith.constant 0 : index
    %c0_9 = arith.constant 0 : index
    %20 = vector.load %arg5[%c0_8, %c0_9] : memref<8x1xf32, #tpu.memory_space<vmem>>, vector<8x1xf32>
    %cst_10 = arith.constant dense<0xFF800000> : vector<8xf32>
    %21 = vector.multi_reduction <maximumf>, %19, %cst_10 [1] : vector<8x8xf32> to vector<8xf32>
    %22 = vector.shape_cast %21 : vector<8xf32> to vector<8x1xf32>
    %23 = arith.maximumf %20, %22 : vector<8x1xf32>
    %24 = arith.subf %20, %23 : vector<8x1xf32>
    %25 = math.exp %24 : vector<8x1xf32>
    %26 = vector.broadcast %23 : vector<8x1xf32> to vector<8x8xf32>
    %27 = arith.subf %19, %26 : vector<8x8xf32>
    %28 = math.exp %27 : vector<8x8xf32>
    %c0_11 = arith.constant 0 : index
    %c0_12 = arith.constant 0 : index
    %29 = vector.load %arg6[%c0_11, %c0_12] : memref<8x1xf32, #tpu.memory_space<vmem>>, vector<8x1xf32>
    %30 = arith.mulf %25, %29 : vector<8x1xf32>
    %cst_13 = arith.constant dense<0.000000e+00> : vector<8xf32>
    %31 = vector.multi_reduction <add>, %28, %cst_13 [1] : vector<8x8xf32> to vector<8xf32>
    %32 = vector.shape_cast %31 : vector<8xf32> to vector<8x1xf32>
    %33 = arith.addf %30, %32 : vector<8x1xf32>
    %c0_14 = arith.constant 0 : index
    %c0_15 = arith.constant 0 : index
    %34 = vector.load %arg6[%c0_14, %c0_15] : memref<8x1xf32, #tpu.memory_space<vmem>>, vector<8x1xf32>
    tpu.vector_store %arg6[%c0_14, %c0_15], %33 {strides = array<i32>} : memref<8x1xf32, #tpu.memory_space<vmem>>, vector<8x1xf32>,
    %c0_16 = arith.constant 0 : index
    %c0_17 = arith.constant 0 : index
    %35 = vector.load %arg5[%c0_16, %c0_17] : memref<8x1xf32, #tpu.memory_space<vmem>>, vector<8x1xf32>
    tpu.vector_store %arg5[%c0_16, %c0_17], %23 {strides = array<i32>} : memref<8x1xf32, #tpu.memory_space<vmem>>, vector<8x1xf32>,
    %c7_i32 = arith.constant 7 : i32
    %36 = vector.broadcast %c7_i32 : i32 to vector<8x8xi32>
    %37 = arith.cmpi slt, %11, %36 : vector<8x8xi32>
    %c1_i32 = arith.constant 1 : i32
    %38 = vector.broadcast %c1_i32 : i32 to vector<8x8xi32>
    %39 = arith.addi %11, %38 : vector<8x8xi32>
    %c7_i32_18 = arith.constant 7 : i32
    %40 = vector.broadcast %c7_i32_18 : i32 to vector<8x8xi32>
    %41 = arith.select %37, %39, %40 : vector<8x8xi1>, vector<8x8xi32>
    %42 = arith.cmpi eq, %15, %41 : vector<8x8xi32>
    %43 = arith.andi %42, %17 : vector<8x8xi1>
    %c0_19 = arith.constant 0 : index
    %c0_20 = arith.constant 0 : index
    %44 = vector.load %arg7[%c0_19, %c0_20] : memref<8x1xf32, #tpu.memory_space<vmem>>, vector<8x1xf32>
    %cst_21 = arith.constant 0.000000e+00 : f32
    %45 = vector.broadcast %cst_21 : f32 to vector<8x8xf32>
    %46 = arith.select %43, %7, %45 : vector<8x8xi1>, vector<8x8xf32>
    %cst_22 = arith.constant dense<0.000000e+00> : vector<8xf32>
    %47 = vector.multi_reduction <add>, %46, %cst_22 [1] : vector<8x8xf32> to vector<8xf32>
    %48 = vector.shape_cast %47 : vector<8xf32> to vector<8x1xf32>
    %49 = arith.addf %44, %48 : vector<8x1xf32>
    %c0_23 = arith.constant 0 : index
    %c0_24 = arith.constant 0 : index
    %50 = vector.load %arg7[%c0_23, %c0_24] : memref<8x1xf32, #tpu.memory_space<vmem>>, vector<8x1xf32>
    tpu.vector_store %arg7[%c0_23, %c0_24], %49 {strides = array<i32>} : memref<8x1xf32, #tpu.memory_space<vmem>>, vector<8x1xf32>,
    %c0_i32_25 = arith.constant 0 : i32
    %51 = arith.cmpi eq, %arg1, %c0_i32_25 : i32
    %52 = arith.extui %51 : i1 to i32
    %c0_i32_26 = arith.constant 0 : i32
    %53 = arith.cmpi ne, %52, %c0_i32_26 : i32
    scf.if %53 {
      %c0_27 = arith.constant 0 : index
      %c0_28 = arith.constant 0 : index
      %54 = vector.load %arg5[%c0_27, %c0_28] : memref<8x1xf32, #tpu.memory_space<vmem>>, vector<8x1xf32>
      %c0_29 = arith.constant 0 : index
      %c0_30 = arith.constant 0 : index
      %55 = vector.load %arg6[%c0_29, %c0_30] : memref<8x1xf32, #tpu.memory_space<vmem>>, vector<8x1xf32>
      %56 = math.log %55 : vector<8x1xf32>
      %57 = arith.addf %54, %56 : vector<8x1xf32>
      %c8_i32_31 = arith.constant 8 : i32
      %58 = arith.muli %arg0, %c8_i32_31 : i32
      %59 = tpu.iota {dimensions = array<i32: 0>} : vector<8x1xi32>
      %60 = vector.broadcast %58 : i32 to vector<8x1xi32>
      %61 = arith.addi %60, %59 : vector<8x1xi32>
      %c8_i32_32 = arith.constant 8 : i32
      %62 = vector.broadcast %c8_i32_32 : i32 to vector<8x1xi32>
      %63 = arith.cmpi slt, %61, %62 : vector<8x1xi32>
      %c0_33 = arith.constant 0 : index
      %c0_34 = arith.constant 0 : index
      %64 = vector.load %arg7[%c0_33, %c0_34] : memref<8x1xf32, #tpu.memory_space<vmem>>, vector<8x1xf32>
      %65 = arith.subf %57, %64 : vector<8x1xf32>
      %cst_35 = arith.constant 0.000000e+00 : f32
      %66 = vector.broadcast %cst_35 : f32 to vector<8x1xf32>
      %67 = arith.select %63, %65, %66 : vector<8x1xi1>, vector<8x1xf32>
      %c0_36 = arith.constant 0 : index
      %c0_37 = arith.constant 0 : index
      %68 = vector.load %arg4[%c0_36, %c0_37] : memref<8x1xf32, #tpu.memory_space<vmem>>, vector<8x1xf32>
      tpu.vector_store %arg4[%c0_36, %c0_37], %67 {strides = array<i32>} : memref<8x1xf32, #tpu.memory_space<vmem>>, vector<8x1xf32>,
    } else {
    }
    return
  }
  func.func @transform_0(%arg0: i32, %arg1: i32) -> (i32, i32) {
    %c0_i32 = arith.constant 0 : i32
    %c0_i32_0 = arith.constant 0 : i32
    return %arg0, %c0_i32 : i32, i32
  }
  func.func @transform_1(%arg0: i32, %arg1: i32) -> (i32, i32) {
    %c0_i32 = arith.constant 0 : i32
    %c0_i32_0 = arith.constant 0 : i32
    return %arg1, %c0_i32 : i32, i32
  }
  func.func @transform_2(%arg0: i32, %arg1: i32) -> (i32, i32) {
    %c0_i32 = arith.constant 0 : i32
    %c0_i32_0 = arith.constant 0 : i32
    return %arg0, %c0_i32 : i32, i32
  }
}

</mosaic_0001>

<llo_original>
// kernel: tpu_custom_call.1
$region0: #{tpu_custom_call.1}
  #allocation0 [shape = 'u32[]', space=smem, size = 0x4, offset = 0x4, fixed_abs, tag = 'smem constant byte address 0x4 - core index']
  #allocation1 [shape = 'u32[144,128]{1,0:T(1,128)}', space=vmem, size = 0x12000, scoped, tag = 'internal scratch']
  #allocation2 [shape = 'f32[8,1]{1,0:T(8,128)}', space=vmem, size = 0x1000, scoped, tag = 'scratch operand']
  #allocation3 [shape = 'f32[8,1]{1,0:T(8,128)}', space=vmem, size = 0x1000, scoped, tag = 'scratch operand']
  #allocation4 [shape = 'f32[8,1]{1,0:T(8,128)}', space=vmem, size = 0x1000, scoped, tag = 'scratch operand']
  %s0 = inlined_call_operand.hbm [shape: f32[8,32], index: 0, kind: input, shape index: {}]
  %s1 = inlined_call_operand.hbm [shape: f32[8,32], index: 1, kind: input, shape index: {}]
  %s2 = inlined_call_operand.hbm [shape: f32[8,1], index: 2, kind: output, shape index: {}]
  %s3 = sld [smem:[#allocation0]]
  $region34: #{tpu_custom_call.1} parent=0
    _
  %s5 = ssub.s32 1, %s3
  %s6 = scalar_select 0, %s5, %s3
  $region1: #{tpu_custom_call.1} parent=0
    #allocation5 [shape = 'u8[4096]{0}', space=vmem, size = 0x1000, scoped, tag = 'input window, operand 0, single buffered']
    #allocation6 [shape = 's32[1]{0}', space=sflag, size = 0x4, scoped, tag = 'scoped memory for tpu_custom_call.1']
    #allocation7 [shape = 's32[1]{0}', space=sflag, size = 0x4, scoped, tag = 'scoped memory for tpu_custom_call.1']
    #allocation8 [shape = 'u8[4096]{0}', space=vmem, size = 0x1000, scoped, tag = 'input window, operand 1, single buffered']
    #allocation9 [shape = 's32[1]{0}', space=sflag, size = 0x4, scoped, tag = 'scoped memory for tpu_custom_call.1']
    #allocation10 [shape = 'u8[4096]{0}', space=vmem, size = 0x1000, scoped, tag = 'output window, operand 0, single buffered']
    %7 = vsyncpa [#allocation6], 0
    %8 = vsyncpa [#allocation9], 0
    %9 = vsyncpa [#allocation7], 0
    // Predicated region
    $region2: #{tpu_custom_call.1} parent=1 // pred_check
      _
    $region3: #{tpu_custom_call.1} parent=1 // pred_check_branch
      %11 = sbr.rel (0) target = $region5
    $region4: #{tpu_custom_call.1} parent=1 // pred_region
      %s13 = ssub.s32 128, 128
      %14 = vsyncadd [#allocation6], %s13
      %s16 = sshll.u32 [#allocation5], 4
      %s17 = int_to_ptr.vmem [resolvable:$true] %s16
      %19 = dma.hbm_to_vmem [thread:$0]  %s0, 128, %s17, [#allocation6]
    $region5: #{tpu_custom_call.1} parent=1 // pred_fallthru
      _
    // Predicated region
    $region6: #{tpu_custom_call.1} parent=1 // pred_check
      _
    $region7: #{tpu_custom_call.1} parent=1 // pred_check_branch
      %21 = sbr.rel (0) target = $region9
    $region8: #{tpu_custom_call.1} parent=1 // pred_region
      %s23 = ssub.s32 128, 128
      %24 = vsyncadd [#allocation9], %s23
      %s26 = sshll.u32 [#allocation8], 4
      %s27 = int_to_ptr.vmem [resolvable:$true] %s26
      %29 = dma.hbm_to_vmem [thread:$0]  %s1, 128, %s27, [#allocation9]
    $region9: #{tpu_custom_call.1} parent=1 // pred_fallthru
      _
    // Predicated region
    $region10: #{tpu_custom_call.1} parent=1 // pred_check
      _
    $region11: #{tpu_custom_call.1} parent=1 // pred_check_branch
      %31 = sbr.rel (0) target = $region13
    $region12: #{tpu_custom_call.1} parent=1 // pred_region
      %32 = dma.done [#allocation6], 128
    $region13: #{tpu_custom_call.1} parent=1 // pred_fallthru
      _
    // Predicated region
    $region14: #{tpu_custom_call.1} parent=1 // pred_check
      _
    $region15: #{tpu_custom_call.1} parent=1 // pred_check_branch
      %34 = sbr.rel (0) target = $region17
    $region16: #{tpu_custom_call.1} parent=1 // pred_region
      %35 = dma.done [#allocation9], 128
    $region17: #{tpu_custom_call.1} parent=1 // pred_fallthru
      _
    %p36 = scmp.eq.s32.totalorder 0, 0
    // Predicated region
    $region18: #{tpu_custom_call.1} parent=1 // pred_check
      %p37 = pneg %p36
    $region19: #{tpu_custom_call.1} parent=1 // pred_check_branch
      %39 = sbr.rel (%p37) target = $region21
    $region20: #{tpu_custom_call.1} parent=1 // pred_region
      %vm40 = vcmask 7168
      %41 = vst.msk [vmem:[#allocation2] sm:$0xff] %vm40, -inf
      %42 = vst.msk [vmem:[#allocation3] sm:$0xff] %vm40, 0.0
      %43 = vst.msk [vmem:[#allocation4] sm:$0xff] %vm40, 0.0
    $region21: #{tpu_custom_call.1} parent=1 // pred_fallthru
      _
    %v44 = vld [vmem:[#allocation5] sm:$0xff]
    %v45 = vld [vmem:[#allocation8] sm:$0xff]
    %vm46 = vcmask 261120
    %v48 = vsel %vm46, %v44, 0
    %v51 = vsel %vm46, %v45, 0
    %53 = vmatprep.subr.mxu0 0.0
    %54 = vmatpush1.xpose.msra.mxu0 %v51
    %55 = vmatprep.subr.mxu0 0.0
    %56 = vmatpush1.xpose.msra.mxu0 0.0
    %57 = vmatprep.subr.mxu0 0.0
    %58 = vmatpush1.xpose.msra.mxu0 0.0
    %59 = vmatprep.subr.mxu0 0.0
    %60 = vmatpush1.xpose.msra.mxu0 0.0
    %61 = vmatprep.subr.mxu0 0.0
    %62 = vmatpush1.xpose.msra.mxu0 0.0
    %63 = vmatprep.subr.mxu0 0.0
    %64 = vmatpush1.xpose.msra.mxu0 0.0
    %65 = vmatprep.subr.mxu0 0.0
    %66 = vmatpush1.xpose.msra.mxu0 0.0
    %67 = vmatprep.subr.mxu0 0.0
    %68 = vmatpush1.xpose.msra.mxu0 0.0
    %69 = vmatprep.subr.mxu0 0.0
    %70 = vmatpush1.xpose.msra.mxu0 0.0
    %71 = vmatprep.subr.mxu0 0.0
    %72 = vmatpush1.xpose.msra.mxu0 0.0
    %73 = vmatprep.subr.mxu0 0.0
    %74 = vmatpush1.xpose.msra.mxu0 0.0
    %75 = vmatprep.subr.mxu0 0.0
    %76 = vmatpush1.xpose.msra.mxu0 0.0
    %77 = vmatprep.subr.mxu0 0.0
    %78 = vmatpush1.xpose.msra.mxu0 0.0
    %79 = vmatprep.subr.mxu0 0.0
    %80 = vmatpush1.xpose.msra.mxu0 0.0
    %81 = vmatprep.subr.mxu0 0.0
    %82 = vmatpush1.xpose.msra.mxu0 0.0
    %83 = vmatprep.subr.mxu0 0.0
    %84 = vmatpush1.xpose.msra.mxu0 0.0
    %85 = vmatprep.subr.mxu0 0.0
    %86 = vmatpush1.xpose.msra.mxu0 0.0
    %87 = vmatprep.subr.mxu0 0.0
    %88 = vmatpush1.xpose.msra.mxu0 0.0
    %89 = vmatprep.subr.mxu0 0.0
    %90 = vmatpush1.xpose.msra.mxu0 0.0
    %91 = vmatprep.subr.mxu0 0.0
    %92 = vmatpush1.xpose.msra.mxu0 0.0
    %93 = vmatprep.subr.mxu0 0.0
    %94 = vmatpush1.xpose.msra.mxu0 0.0
    %95 = vmatprep.subr.mxu0 0.0
    %96 = vmatpush1.xpose.msra.mxu0 0.0
    %97 = vmatprep.subr.mxu0 0.0
    %98 = vmatpush1.xpose.msra.mxu0 0.0
    %99 = vmatprep.subr.mxu0 0.0
    %100 = vmatpush1.xpose.msra.mxu0 0.0
    %101 = vmatprep.subr.mxu0 0.0
    %102 = vmatpush1.xpose.msra.mxu0 0.0
    %103 = vmatprep.subr.mxu0 0.0
    %104 = vmatpush1.xpose.msra.mxu0 0.0
    %105 = vmatprep.subr.mxu0 0.0
    %106 = vmatpush1.xpose.msra.mxu0 0.0
    %107 = vmatprep.subr.mxu0 0.0
    %108 = vmatpush1.xpose.msra.mxu0 0.0
    %109 = vmatprep.subr.mxu0 0.0
    %110 = vmatpush1.xpose.msra.mxu0 0.0
    %111 = vmatprep.subr.mxu0 0.0
    %112 = vmatpush1.xpose.msra.mxu0 0.0
    %113 = vmatprep.subr.mxu0 0.0
    %114 = vmatpush1.xpose.msra.mxu0 0.0
    %115 = vmatprep.subr.mxu0 0.0
    %116 = vmatpush1.xpose.msra.mxu0 0.0
    %117 = vmatprep.mubr.f32.mxu0 0.0
    %118 = vmatmul.mubr.f32.gmra.mrb[0].mxu0 %v48
    %v119 = vpop.f32.mrb[0].mxu0
    %v120 = vadd.f32 0.0, %v119
    %v121 = vpop.f32.mrb[0].mxu0
    %122 = vdwg.mxu0
    %v123 = vmul.f32 %v120, 2.0
    %s124 = smul.u32 0, 8
    %v125 = vlaneseq
    %v126 = vshrl.u32 %v125, 7
    %v127 = vstv %s124
    %v128 = vadd.s32 %v127, %v126
    %s129 = smul.u32 0, 8
    %v130 = vlaneseq
    %v131 = vand.u32 %v130, 127
    %v132 = vstv %s129
    %v133 = vadd.s32 %v132, %v131
    %vm134 = vcmp.lt.s32.totalorder %v133, 8
    %v135 = vsel %vm134, %v123, -inf
    %v136 = vld [vmem:[#allocation2] sm:$0xff]
    %vm137 = vcmask 64512
    %v138 = vsel %vm137, %v135, -inf
    %139 = vmax.xlane.f32.xlu0 %v138
    %v140 = vpop.xlane.xlu0 %139
    %v141 = vmax.f32 %v136, %v140
    %v142 = vsub.f32 %v136, %v141
    %v143 = vmul.f32 %v142, 1.442695
    %v144 = vpow.pop %v143
    %146 = vset.pattern.permute.xlu0 0
    %147 = vperm.xlu0 %146, %v141
    %v148 = vpop.permute.xlu0 %147
    %v150 = vsub.f32 %v135, %v148
    %v151 = vmul.f32 %v150, 1.442695
    %v152 = vpow.pop %v151
    %v153 = vld [vmem:[#allocation3] sm:$0xff]
    %v154 = vmul.f32 %v144, %v153
    %v155 = vsel %vm137, %v152, 0.0
    %156 = vadd.xlane.f32.xlu0 %v155
    %v157 = vpop.xlane.xlu0 %156
    %v158 = vadd.f32 %v154, %v157
    %vm159 = vcmask 7168
    %160 = vst.msk [vmem:[#allocation3] sm:$0xff] %vm159, %v158
    %161 = vst.msk [vmem:[#allocation2] sm:$0xff] %vm159, %v141
    %vm162 = vcmp.lt.s32.totalorder %v128, 7
    %v163 = vadd.s32 %v128, 1
    %v164 = vsel %vm162, %v163, 7
    %vm165 = vcmp.eq.s32.totalorder %v133, %v164
    %vm166 = vmand %vm165, %vm134
    %v167 = vld [vmem:[#allocation4] sm:$0xff]
    %v168 = vsel %vm166, %v123, 0.0
    %v169 = vsel %vm137, %v168, 0.0
    %170 = vadd.xlane.f32.xlu0 %v169
    %v171 = vpop.xlane.xlu0 %170
    %v172 = vadd.f32 %v167, %v171
    %173 = vst.msk [vmem:[#allocation4] sm:$0xff] %vm159, %v172
    // Predicated region
    $region22: #{tpu_custom_call.1} parent=1 // pred_check
      %p174 = pneg %p36
    $region23: #{tpu_custom_call.1} parent=1 // pred_check_branch
      %176 = sbr.rel (%p174) target = $region25
    $region24: #{tpu_custom_call.1} parent=1 // pred_region
      %v177 = vld [vmem:[#allocation2] sm:$0xff]
      %v178 = vld [vmem:[#allocation3] sm:$0xff]
      %v179 = vlog2.pop %v178
      %v180 = vmul.f32 %v179, 0.6931472
      %v181 = vadd.f32 %v177, %v180
      %vm182 = vcmp.lt.s32.totalorder %v128, 8
      %v183 = vld [vmem:[#allocation4] sm:$0xff]
      %v184 = vsub.f32 %v181, %v183
      %v185 = vsel %vm182, %v184, 0.0
      %186 = vst.msk [vmem:[#allocation10] sm:$0xff] %vm159, %v185
    $region25: #{tpu_custom_call.1} parent=1 // pred_fallthru
      _
    // Predicated region
    $region26: #{tpu_custom_call.1} parent=1 // pred_check
      _
    $region27: #{tpu_custom_call.1} parent=1 // pred_check_branch
      %188 = sbr.rel (0) target = $region29
    $region28: #{tpu_custom_call.1} parent=1 // pred_region
      %s190 = ssub.s32 128, 128
      %191 = vsyncadd [#allocation7], %s190
      %s193 = sshll.u32 [#allocation10], 4
      %s194 = int_to_ptr.vmem [resolvable:$true] %s193
      %196 = dma.vmem_to_hbm [thread:$0]  %s194, 128, %s2, [#allocation7]
    $region29: #{tpu_custom_call.1} parent=1 // pred_fallthru
      _
    // Predicated region
    $region30: #{tpu_custom_call.1} parent=1 // pred_check
      _
    $region31: #{tpu_custom_call.1} parent=1 // pred_check_branch
      %198 = sbr.rel (0) target = $region33
    $region32: #{tpu_custom_call.1} parent=1 // pred_region
      %199 = dma.done [#allocation7], 128
    $region33: #{tpu_custom_call.1} parent=1 // pred_fallthru
      _
    %200 = vsyncpa [#allocation6], 1
    %201 = vsyncpa [#allocation9], 1
    %202 = vsyncpa [#allocation7], 1

</llo_original>
